<compile_context>
chip_gen: v7x
topology: tpu7x:2x2x1
jax: 0.10.0
libtpu: 0.0.40
codegen_flags: <defaults>
</compile_context>

<pallas_src>
import functools

import jax
import jax.numpy as jnp
from jax import lax
from jax.experimental import pallas as pl
from jax.experimental.pallas import tpu as pltpu

KH = KW = 4
STRIDE = 2
PAD = 1
EPS = 1e-5  # nn.InstanceNorm2d default eps


def _genblock_kernel(a_ref, w_ref, o_ref, *, p, wout):
    # a_ref: (1, S, 8*Cin)   bf16  tap planes of one sample, S = P + wout
    # w_ref: (2, 8*Cin, TCO) bf16  conv weight grouped by row offset g = kh // 2
    # o_ref: (1, P, TCO)           normalized + ReLU'd output tile, P = hout*wout
    #
    # Conv2d(4x4, stride 2, reflect-padded) == 2 MXU matmuls with K = 8*Cin at
    # flattened-row offsets {0, wout} (row offset g folds kh = 2*g + rp).
    y = jnp.dot(a_ref[0, 0:p, :], w_ref[0], preferred_element_type=jnp.float32)
    y = y + jnp.dot(a_ref[0, wout:wout + p, :], w_ref[1],
                    preferred_element_type=jnp.float32)

    # InstanceNorm2d (affine=False, biased variance, eps) + ReLU in one read pass:
    # var = E[y^2] - mean^2 (f32), store directly without a centered temporary.
    mean = jnp.mean(y, axis=0, keepdims=True)                  # (1, TCO)
    msq = jnp.mean(y * y, axis=0, keepdims=True)               # (1, TCO)
    var = jnp.maximum(msq - mean * mean, 0.0)
    o_ref[0] = jnp.maximum((y - mean) * lax.rsqrt(var + EPS), 0.0).astype(o_ref.dtype)


def _preferred_lane_tile():
    # 256-wide MXU on v6e / v7x; 128-wide on v5e / v4 and older.
    try:
        kind = jax.devices()[0].device_kind.lower()
    except Exception:
        return 256
    for tag in ("v2", "v3", "v4", "v5 lite", "v5lite", "v5e"):
        if tag in kind:
            return 128
    return 256


def genblock_forward(x_nchw, weight, out_dtype=jnp.float32):
    """GenBlock forward (downsampling=True, activation='relu', use_dropout=False).

    x_nchw : (N, Cin, H, W) float32, H and W even
    weight : (Cout, Cin, 4, 4) float32 (PyTorch Conv2d OIHW layout)
    returns: (N, Cout, H//2, W//2) out_dtype
    """
    # TODO(synk): ConvTranspose2d (downsampling=False), LeakyReLU(0.2) option and the
    # training-mode Dropout(0.5) branch are not part of the default forward; omitted.
    N, Cin, H, W = x_nchw.shape
    Cout = weight.shape[0]
    assert H % 2 == 0 and W % 2 == 0, "k=4, s=2, p=1 downsampling expects even H, W"
    Hout, Wout = H // STRIDE, W // STRIDE
    P = Hout * Wout
    S = P + Wout                       # (Hout + 1) * Wout
    K8 = 2 * KW * Cin                  # 8 * Cin: folded tap/contraction dim

    # Lane tile: 256 on 256-wide-MXU chips when it does not force extra Cout padding.
    cout_p128 = ((Cout + 127) // 128) * 128
    TCO = 256 if (_preferred_lane_tile() >= 256 and cout_p128 % 256 == 0) else 128
    Cout_p = ((Cout + TCO - 1) // TCO) * TCO
    n_co = Cout_p // TCO

    # Reflect pad, NCHW -> NHWC, bf16 operands.
    xp = jnp.pad(x_nchw, ((0, 0), (0, 0), (PAD, PAD), (PAD, PAD)), mode="reflect")
    xp = jnp.transpose(xp, (0, 2, 3, 1)).astype(jnp.bfloat16)    # (N, H+2, W+2, Cin)

    # Tap planes folded into the channel dim: slot (rp, kw) holds padded rows
    # {rp, rp+2, ...} and padded cols {kw, kw+2, ...}; channel index
    # (rp*KW + kw)*Cin + c, result (N, S, 8*Cin).
    planes = []
    for rp in range(2):
        for kw in range(KW):
            t = xp[:, rp:rp + STRIDE * (Hout + 1):STRIDE,
                   kw:kw + STRIDE * Wout:STRIDE, :]              # (N, Hout+1, Wout, Cin)
            planes.append(t.reshape(N, S, Cin))
    a = jnp.concatenate(planes, axis=-1)                         # (N, S, 8*Cin) bf16

    # (Cout, Cin, kh, kw) -> (g, (rp*KW + kw)*Cin + c, Cout_p) with kh = 2*g + rp;
    # zero-pad Cout to the lane tile.
    wt = jnp.transpose(weight, (2, 3, 1, 0))                     # (KH, KW, Cin, Cout)
    w2 = wt.reshape(2, 2, KW, Cin, Cout).reshape(2, K8, Cout)
    w2 = jnp.pad(w2, ((0, 0), (0, 0), (0, Cout_p - Cout))).astype(jnp.bfloat16)

    # Per-step VMEM footprint -> explicit scoped limit (>= 32 MiB, <= 48 MiB for v7x).
    out_bytes = jnp.dtype(out_dtype).itemsize
    vmem_need = (2 * S * K8 * 2              # double-buffered bf16 tap planes
                 + 2 * 2 * K8 * TCO * 2      # double-buffered bf16 weights
                 + 2 * P * TCO * out_bytes   # double-buffered output tile
                 + 2 * P * TCO * 4)          # f32 conv result + epilogue temporaries
    vmem_limit = int(min(max(vmem_need + (4 << 20), 32 << 20), 48 << 20))

    kernel = functools.partial(_genblock_kernel, p=P, wout=Wout)
    out = pl.pallas_call(
        kernel,
        out_shape=jax.ShapeDtypeStruct((N, P, Cout_p), out_dtype),
        grid_spec=pltpu.PrefetchScalarGridSpec(
            num_scalar_prefetch=0,
            # Keep N outer, co inner: the tap-plane block index is constant across co,
            # so Pallas keeps the sample's input resident instead of re-DMAing it.
            grid=(N, n_co),
            in_specs=[
                pl.BlockSpec((1, S, K8), lambda n, co: (n, 0, 0)),
                pl.BlockSpec((2, K8, TCO), lambda n, co: (0, 0, co)),
            ],
            out_specs=pl.BlockSpec((1, P, TCO), lambda n, co: (n, 0, co)),
        ),
        compiler_params=pltpu.CompilerParams(
            dimension_semantics=("parallel", "parallel"),
            vmem_limit_bytes=vmem_limit),
    )(a, w2)

    # Drop the channel padding; (N, P, Cout) -> NCHW.  (Keep NHWC end-to-end instead
    # if the downstream block also consumes NHWC.)
    out = out[:, :, :Cout].reshape(N, Hout, Wout, Cout)
    return jnp.transpose(out, (0, 3, 1, 2))


def genblock_reference(x_nchw, weight):
    """Plain-JAX (f32, HIGHEST) reference of the same forward pass."""
    xp = jnp.pad(x_nchw, ((0, 0), (0, 0), (PAD, PAD), (PAD, PAD)), mode="reflect")
    y = lax.conv_general_dilated(
        xp, weight, window_strides=(STRIDE, STRIDE), padding="VALID",
        dimension_numbers=("NCHW", "OIHW", "NCHW"),
        precision=lax.Precision.HIGHEST)
    mean = jnp.mean(y, axis=(2, 3), keepdims=True)
    var = jnp.mean((y - mean) ** 2, axis=(2, 3), keepdims=True)
    y = (y - mean) / jnp.sqrt(var + EPS)
    return jnp.maximum(y, 0.0)


if __name__ == "__main__":
    # Small deterministic example: N=2, Cin=4, H=W=16, Cout=8.
    key = jax.random.PRNGKey(0)
    kx, kw = jax.random.split(key)
    N, Cin, H, W, Cout = 2, 4, 16, 16, 8

    x = jax.random.normal(kx, (N, Cin, H, W), dtype=jnp.float32)
    weight = 0.1 * jax.random.normal(kw, (Cout, Cin, KH, KW), dtype=jnp.float32)

    out = jax.block_until_ready(genblock_forward(x, weight))
    assert out.shape == (N, Cout, H // 2, W // 2), out.shape

    # Tight check vs. a reference using the same bf16 operand rounding (kernel does
    # bf16 x bf16 with exact f32 MXU accumulation, so this should match closely).
    xb = x.astype(jnp.bfloat16).astype(jnp.float32)
    wb = weight.astype(jnp.bfloat16).astype(jnp.float32)
    ref_bf16 = genblock_reference(xb, wb)
    assert jnp.allclose(out, ref_bf16, atol=2e-3, rtol=2e-3), \
        float(jnp.max(jnp.abs(out - ref_bf16)))

    # Looser check vs. the pure-f32 module semantics (bf16-operand tolerance; inherent).
    ref_f32 = genblock_reference(x, weight)
    assert jnp.allclose(out, ref_f32, atol=1e-1, rtol=1e-1), \
        float(jnp.max(jnp.abs(out - ref_f32)))

    # bf16-output path (halves output HBM writes / VMEM) for bf16-consuming next blocks.
    out_bf16 = jax.block_until_ready(
        genblock_forward(x, weight, out_dtype=jnp.bfloat16)).astype(jnp.float32)
    assert jnp.allclose(out_bf16, ref_bf16, atol=3e-2, rtol=3e-2), \
        float(jnp.max(jnp.abs(out_bf16 - ref_bf16)))

    print("KERNEL_OK")
</pallas_src>

<mosaic_0001>
module attributes {stable_mosaic.version = 11 : i64} {
  func.func @_genblock_kernel(%arg0: i32, %arg1: i32, %arg2: memref<1x72x32xbf16, #tpu.memory_space<vmem>>, %arg3: memref<2x32x128xbf16, #tpu.memory_space<vmem>>, %arg4: memref<1x64x128xf32, #tpu.memory_space<vmem>>) attributes {dimension_semantics = [#tpu.dimension_semantics<parallel>, #tpu.dimension_semantics<parallel>], iteration_bounds = array<i64: 2, 1>, scalar_prefetch = 0 : i64, scratch_operands = 0 : i64, tpu.core_type = #tpu.core_type<tc>, window_params = [{transform_indices = @transform_0, window_bounds = array<i64: 1, 72, 32>}, {transform_indices = @transform_1, window_bounds = array<i64: 2, 32, 128>}, {transform_indices = @transform_2, window_bounds = array<i64: 1, 64, 128>}]} {
    %c0 = arith.constant 0 : index
    %c0_0 = arith.constant 0 : index
    %c0_1 = arith.constant 0 : index
    %0 = vector.load %arg2[%c0, %c0_0, %c0_1] : memref<1x72x32xbf16, #tpu.memory_space<vmem>>, vector<1x64x32xbf16>
    %1 = vector.shape_cast %0 : vector<1x64x32xbf16> to vector<64x32xbf16>
    %c0_2 = arith.constant 0 : index
    %c0_3 = arith.constant 0 : index
    %c0_4 = arith.constant 0 : index
    %2 = vector.load %arg3[%c0_2, %c0_3, %c0_4] : memref<2x32x128xbf16, #tpu.memory_space<vmem>>, vector<1x32x128xbf16>
    %3 = vector.shape_cast %2 : vector<1x32x128xbf16> to vector<32x128xbf16>
    %cst = arith.constant dense<0.000000e+00> : vector<64x128xf32>
    %4 = tpu.matmul %1, %3, %cst {dimension_numbers = #tpu.dot_dimension_numbers<[1], [0], [0], [1], [0, 0, 1, 1], [], []>} : vector<64x32xbf16>, vector<32x128xbf16>, vector<64x128xf32> -> vector<64x128xf32>
    %c0_5 = arith.constant 0 : index
    %c8 = arith.constant 8 : index
    %c0_6 = arith.constant 0 : index
    %5 = vector.load %arg2[%c0_5, %c8, %c0_6] : memref<1x72x32xbf16, #tpu.memory_space<vmem>>, vector<1x64x32xbf16>
    %6 = vector.shape_cast %5 : vector<1x64x32xbf16> to vector<64x32xbf16>
    %c1 = arith.constant 1 : index
    %c0_7 = arith.constant 0 : index
    %c0_8 = arith.constant 0 : index
    %7 = vector.load %arg3[%c1, %c0_7, %c0_8] : memref<2x32x128xbf16, #tpu.memory_space<vmem>>, vector<1x32x128xbf16>
    %8 = vector.shape_cast %7 : vector<1x32x128xbf16> to vector<32x128xbf16>
    %cst_9 = arith.constant dense<0.000000e+00> : vector<64x128xf32>
    %9 = tpu.matmul %6, %8, %cst_9 {dimension_numbers = #tpu.dot_dimension_numbers<[1], [0], [0], [1], [0, 0, 1, 1], [], []>} : vector<64x32xbf16>, vector<32x128xbf16>, vector<64x128xf32> -> vector<64x128xf32>
    %10 = arith.addf %4, %9 : vector<64x128xf32>
    %cst_10 = arith.constant dense<0.000000e+00> : vector<128xf32>
    %11 = vector.multi_reduction <add>, %10, %cst_10 [0] : vector<64x128xf32> to vector<128xf32>
    %12 = vector.shape_cast %11 : vector<128xf32> to vector<1x128xf32>
    %cst_11 = arith.constant 6.400000e+01 : f32
    %13 = vector.broadcast %cst_11 : f32 to vector<1x128xf32>
    %14 = arith.divf %12, %13 : vector<1x128xf32>
    %15 = arith.mulf %10, %10 : vector<64x128xf32>
    %cst_12 = arith.constant dense<0.000000e+00> : vector<128xf32>
    %16 = vector.multi_reduction <add>, %15, %cst_12 [0] : vector<64x128xf32> to vector<128xf32>
    %17 = vector.shape_cast %16 : vector<128xf32> to vector<1x128xf32>
    %cst_13 = arith.constant 6.400000e+01 : f32
    %18 = vector.broadcast %cst_13 : f32 to vector<1x128xf32>
    %19 = arith.divf %17, %18 : vector<1x128xf32>
    %20 = arith.mulf %14, %14 : vector<1x128xf32>
    %21 = arith.subf %19, %20 : vector<1x128xf32>
    %cst_14 = arith.constant 0.000000e+00 : f32
    %22 = vector.broadcast %cst_14 : f32 to vector<1x128xf32>
    %23 = arith.maximumf %21, %22 : vector<1x128xf32>
    %24 = vector.broadcast %14 : vector<1x128xf32> to vector<64x128xf32>
    %25 = arith.subf %10, %24 : vector<64x128xf32>
    %cst_15 = arith.constant 9.99999974E-6 : f32
    %26 = vector.broadcast %cst_15 : f32 to vector<1x128xf32>
    %27 = arith.addf %23, %26 : vector<1x128xf32>
    %28 = math.rsqrt %27 : vector<1x128xf32>
    %29 = vector.broadcast %28 : vector<1x128xf32> to vector<64x128xf32>
    %30 = arith.mulf %25, %29 : vector<64x128xf32>
    %cst_16 = arith.constant 0.000000e+00 : f32
    %31 = vector.broadcast %cst_16 : f32 to vector<64x128xf32>
    %32 = arith.maximumf %30, %31 : vector<64x128xf32>
    %c0_17 = arith.constant 0 : index
    %c0_18 = arith.constant 0 : index
    %c0_19 = arith.constant 0 : index
    %33 = vector.load %arg4[%c0_17, %c0_18, %c0_19] : memref<1x64x128xf32, #tpu.memory_space<vmem>>, vector<1x64x128xf32>
    %34 = vector.shape_cast %33 : vector<1x64x128xf32> to vector<64x128xf32>
    %35 = vector.shape_cast %32 : vector<64x128xf32> to vector<1x64x128xf32>
    tpu.vector_store %arg4[%c0_17, %c0_18, %c0_19], %35 {strides = array<i32>} : memref<1x64x128xf32, #tpu.memory_space<vmem>>, vector<1x64x128xf32>,
    return
  }
  func.func @transform_0(%arg0: i32, %arg1: i32) -> (i32, i32, i32) {
    %c0_i32 = arith.constant 0 : i32
    %c0_i32_0 = arith.constant 0 : i32
    %c0_i32_1 = arith.constant 0 : i32
    return %arg0, %c0_i32, %c0_i32_0 : i32, i32, i32
  }
  func.func @transform_1(%arg0: i32, %arg1: i32) -> (i32, i32, i32) {
    %c0_i32 = arith.constant 0 : i32
    %c0_i32_0 = arith.constant 0 : i32
    %c0_i32_1 = arith.constant 0 : i32
    return %c0_i32, %c0_i32_0, %arg1 : i32, i32, i32
  }
  func.func @transform_2(%arg0: i32, %arg1: i32) -> (i32, i32, i32) {
    %c0_i32 = arith.constant 0 : i32
    %c0_i32_0 = arith.constant 0 : i32
    return %arg0, %c0_i32, %arg1 : i32, i32, i32
  }
}

</mosaic_0001>

<llo_original>
// kernel: tpu_custom_call.1
$region0: #{tpu_custom_call.1}
  #allocation0 [shape = 'u32[]', space=smem, size = 0x4, offset = 0x4, fixed_abs, tag = 'smem constant byte address 0x4 - core index']
  #allocation1 [shape = 'u32[144,128]{1,0:T(1,128)}', space=vmem, size = 0x12000, scoped, tag = 'internal scratch']
  %s0 = inlined_call_operand.vmem [shape: bf16[2,72,32], index: 0, kind: input, shape index: {}]
  %s1 = inlined_call_operand.vmem [shape: bf16[2,32,128], index: 1, kind: input, shape index: {}]
  %s2 = inlined_call_operand.hbm [shape: f32[2,64,128], index: 2, kind: output, shape index: {}]
  %s3 = sld [smem:[#allocation0]]
  $region41: #{tpu_custom_call.1} parent=0
    _
  %s5 = ssub.s32 1, %s3
  %s6 = scalar_select 0, %s5, %s3
  $region1: #{tpu_custom_call.1} parent=0
    #allocation2 [shape = 'u8[65536]{0}', space=vmem, size = 0x10000, scoped, tag = 'output window, operand 0']
    #allocation3 [shape = 's32[2]{0}', space=sflag, size = 0x8, scoped, tag = 'scoped memory for tpu_custom_call.1']
    %7 = vsyncpa [#allocation3], 0
    %s8 = scalar_lea.sflag [#allocation3], 1
    %9 = vsyncpa %s8, 0
    loop: start=0, step=1, limit=4
    $region2: #{tpu_custom_call.1} parent=1 // loop_pre_header
      _
    $region3: #{tpu_custom_call.1} parent=1 // loop_header
      %s11 = sphi 0, %s15
      %p12 = scmp.ge.s32.totalorder %s11, 4
      %s18 = sphi 0, %s30
      %s19 = sphi 0, %s26
      %s20 = sphi 0, %s18
      %s21 = sphi 0, %s19
      %s22 = sphi 0, %s20
      %s23 = sphi 0, %s21
      %s33 = sphi 0, %s35
      %s36 = sphi 0, %s33
      %s37 = sphi 0, %s36
      %s53 = sphi 0, %s37
      %s59 = sphi 0, %s61
      %s62 = sphi 0, %s59
      %s63 = sphi 0, %s62
      %s79 = sphi 0, %s63
      %s87 = sphi 0, %s89
      %s90 = sphi 0, %s87
      %s91 = sphi 0, %s90
      %s107 = sphi 0, %s91
    $region4: #{tpu_custom_call.1} parent=1 // loop_header_branch
      %14 = sbr.rel (%p12) target = $region8
    $region5: #{tpu_custom_call.1} parent=1 // loop_body
      %s16 = ssub.s32 %s11, 1
      %s17 = ssub.s32 %s11, 2
      %s24 = sadd.s32 1, %s19
      %p25 = scmp.ge.s32.totalorder %s24, 1
      %s26 = scalar_select %p25, 0, %s24
      %s27 = sadd.s32 1, %s18
      %s28 = scalar_select %p25, %s27, %s18
      %p29 = scmp.ge.s32.totalorder %s28, 2
      %s30 = scalar_select %p29, 0, %s28
      %s31 = ssub.s32 %s18, %s30
      %p32 = scmp.eq.s32.totalorder %s31, 0
      %s34 = sadd.s32 %s33, 1
      %s35 = scalar_select %p32, %s33, %s34
      %p38 = pneg %p32
      %p39 = scmp.eq.s32.totalorder %s11, 1
      %p40 = por %p38, %p39
      %p41 = scmp.ne.s32.totalorder %s33, %s36
      %p42 = scmp.eq.s32.totalorder %s11, 0
      %p43 = por %p41, %p42
      %p44 = scmp.ne.s32.totalorder %s33, %s36
      %p45 = scmp.eq.s32.totalorder %s16, 1
      %p46 = por %p44, %p45
      %p47 = scmp.ne.s32.totalorder %s36, %s37
      %p48 = scmp.eq.s32.totalorder %s16, 0
      %p49 = por %p47, %p48
      %p50 = scmp.ne.s32.totalorder %s36, %s37
      %p51 = scmp.eq.s32.totalorder %s17, 1
      %p52 = por %p50, %p51
      %p54 = scmp.ne.s32.totalorder %s37, %s53
      %p55 = scmp.eq.s32.totalorder %s17, 0
      %p56 = por %p54, %p55
      %s57 = ssub.s32 %s19, %s26
      %p58 = scmp.eq.s32.totalorder %s57, 0
      %s60 = sadd.s32 %s59, 1
      %s61 = scalar_select %p58, %s59, %s60
      %p64 = pneg %p58
      %p65 = scmp.eq.s32.totalorder %s11, 1
      %p66 = por %p64, %p65
      %p67 = scmp.ne.s32.totalorder %s59, %s62
      %p68 = scmp.eq.s32.totalorder %s11, 0
      %p69 = por %p67, %p68
      %p70 = scmp.ne.s32.totalorder %s59, %s62
      %p71 = scmp.eq.s32.totalorder %s16, 1
      %p72 = por %p70, %p71
      %p73 = scmp.ne.s32.totalorder %s62, %s63
      %p74 = scmp.eq.s32.totalorder %s16, 0
      %p75 = por %p73, %p74
      %p76 = scmp.ne.s32.totalorder %s62, %s63
      %p77 = scmp.eq.s32.totalorder %s17, 1
      %p78 = por %p76, %p77
      %p80 = scmp.ne.s32.totalorder %s63, %s79
      %p81 = scmp.eq.s32.totalorder %s17, 0
      %p82 = por %p80, %p81
      %s83 = ssub.s32 %s18, %s30
      %s84 = ssub.s32 %s19, %s26
      %s85 = sor.u32 %s83, %s84
      %p86 = scmp.eq.s32.totalorder %s85, 0
      %s88 = sadd.s32 %s87, 1
      %s89 = scalar_select %p86, %s87, %s88
      %p92 = pneg %p86
      %p93 = scmp.eq.s32.totalorder %s11, 1
      %p94 = por %p92, %p93
      %p95 = scmp.ne.s32.totalorder %s87, %s90
      %p96 = scmp.eq.s32.totalorder %s11, 0
      %p97 = por %p95, %p96
      %p98 = scmp.ne.s32.totalorder %s87, %s90
      %p99 = scmp.eq.s32.totalorder %s16, 1
      %p100 = por %p98, %p99
      %p101 = scmp.ne.s32.totalorder %s90, %s91
      %p102 = scmp.eq.s32.totalorder %s16, 0
      %p103 = por %p101, %p102
      %p104 = scmp.ne.s32.totalorder %s90, %s91
      %p105 = scmp.eq.s32.totalorder %s17, 1
      %p106 = por %p104, %p105
      %p108 = scmp.ne.s32.totalorder %s91, %s107
      %p109 = scmp.eq.s32.totalorder %s17, 0
      %p110 = por %p108, %p109
      %p111 = scmp.le.s32.totalorder 1, %s11
      %p112 = scmp.lt.s32.totalorder %s11, 3
      %p113 = pnand %p111, %p112
      %p114 = pneg %p113
      // Predicated region
      $region9: #{tpu_custom_call.1} parent=5 // pred_check
        _
      $region10: #{tpu_custom_call.1} parent=5 // pred_check_branch
        %116 = sbr.rel (%p113) target = $region12
      $region11: #{tpu_custom_call.1} parent=5 // pred_region
        %s117 = ssub.s32 %s11, 1
        // Predicated region
        $region13: #{tpu_custom_call.1} parent=11 // pred_check
          %p118 = pneg %p75
        $region14: #{tpu_custom_call.1} parent=11 // pred_check_branch
          %120 = sbr.rel (%p118) target = $region16
        $region15: #{tpu_custom_call.1} parent=11 // pred_region
          %p121 = scmp.lt.s32.totalorder %s21, 0
          %s122 = scalar_select %p121, %s21, 0
          %s123 = smul.addr %s122, 4
          %s124 = scalar_lea.vmem %s1, %s123
        $region16: #{tpu_custom_call.1} parent=11 // pred_fallthru
          _
      $region12: #{tpu_custom_call.1} parent=5 // pred_fallthru
        _
      %p125 = scmp.lt.s32.totalorder %s11, 2
      // Predicated region
      $region17: #{tpu_custom_call.1} parent=5 // pred_check
        %p126 = pneg %p125
      $region18: #{tpu_custom_call.1} parent=5 // pred_check_branch
        %128 = sbr.rel (%p126) target = $region20
      $region19: #{tpu_custom_call.1} parent=5 // pred_region
        // Predicated region
        $region21: #{tpu_custom_call.1} parent=19 // pred_check
          %p129 = pneg %p43
        $region22: #{tpu_custom_call.1} parent=19 // pred_check_branch
          %131 = sbr.rel (%p129) target = $region24
        $region23: #{tpu_custom_call.1} parent=19 // pred_region
          %p132 = scmp.lt.s32.totalorder %s18, 1
          %s133 = scalar_select %p132, %s18, 1
          %s134 = smul.addr %s133, 9
          %s135 = smul.addr %s134, 4
          %s136 = scalar_lea.vmem %s0, %s135
        $region24: #{tpu_custom_call.1} parent=19 // pred_fallthru
          _
      $region20: #{tpu_custom_call.1} parent=5 // pred_fallthru
        _
      %p137 = scmp.le.s32.totalorder 1, %s11
      %p138 = scmp.lt.s32.totalorder %s11, 3
      %p139 = pnand %p137, %p138
      %p140 = pneg %p139
      // Predicated region
      $region25: #{tpu_custom_call.1} parent=5 // pred_check
        _
      $region26: #{tpu_custom_call.1} parent=5 // pred_check_branch
        %142 = sbr.rel (%p139) target = $region28
      $region27: #{tpu_custom_call.1} parent=5 // pred_region
        %s143 = ssub.s32 %s11, 1
        %p144 = scmp.lt.s32.totalorder %s20, 1
        %s145 = scalar_select %p144, %s20, 1
        %s146 = smul.addr %s145, 9
        %s147 = smul.addr %s146, 4
        %s148 = scalar_lea.vmem %s0, %s147
        %p149 = pneg %p49
        %p150 = pneg %p46
        %p151 = scmp.lt.s32.totalorder %s21, 0
        %s152 = scalar_select %p151, %s21, 0
        %s153 = smul.addr %s152, 4
        %s154 = scalar_lea.vmem %s1, %s153
        %p155 = pneg %p75
        %p156 = pneg %p72
        %p157 = pneg %p103
        %p158 = pneg %p100
        %s159 = sand.u32 %s90, 1
        %s160 = scalar_lea.sflag [#allocation3], %s159
        %s161 = sand.u32 %s90, 1
        %s162 = smul.addr %s161, 64
        %s163 = scalar_lea.vmem [#allocation2], %s162
        %p164 = scmp.lt.s32.totalorder %s20, 1
        %s165 = scalar_select %p164, %s20, 1
        %s166 = smul.addr %s165, 9
        %s167 = smul.addr %s166, 4
        %s168 = scalar_lea.vmem %s0, %s167
        %p169 = scmp.lt.s32.totalorder %s21, 0
        %s170 = scalar_select %p169, %s21, 0
        %s171 = smul.addr %s170, 4
        %s172 = scalar_lea.vmem %s1, %s171
        %v174 = vld [vmem:[%s168] sm:$0xf]
        %v175 = vld [vmem:[%s168 + $0x4] sm:$0xf]
        %v176 = vld [vmem:[%s168 + $0x8] sm:$0xf]
        %v177 = vld [vmem:[%s168 + $0xc] sm:$0xf]
        %v178 = vld [vmem:[%s168 + $0x10] sm:$0xf]
        %v179 = vld [vmem:[%s168 + $0x14] sm:$0xf]
        %v180 = vld [vmem:[%s168 + $0x18] sm:$0xf]
        %v181 = vld [vmem:[%s168 + $0x1c] sm:$0xf]
        %v182 = vld [vmem:[%s172] sm:$0xf]
        %v183 = vld [vmem:[%s172 + $0x4] sm:$0xf]
        %v184 = vld [vmem:[%s172 + $0x8] sm:$0xf]
        %v185 = vld [vmem:[%s172 + $0xc] sm:$0xf]
        %v186 = vld [vmem:[%s168 + $0x20] sm:$0xf]
        %s187 = scalar_lea.vmem %s172, 16
        %v188 = vld [vmem:[%s187] sm:$0xf]
        %v189 = vld [vmem:[%s187 + $0x4] sm:$0xf]
        %v190 = vld [vmem:[%s187 + $0x8] sm:$0xf]
        %v191 = vld [vmem:[%s187 + $0xc] sm:$0xf]
        %v200 = vunpack.c.l.b16 %v175
        %v201 = vunpack.c.l.b16 %v176
        %v202 = vunpack.c.l.b16 %v177
        %v203 = vunpack.c.l.b16 %v178
        %v204 = vunpack.c.l.b16 %v179
        %v205 = vunpack.c.l.b16 %v180
        %v206 = vunpack.c.l.b16 %v181
        %v207 = vunpack.c.l.b16 %v186
        %v208 = vpack.c.b16 %v201, %v200
        %v209 = vpack.c.b16 %v203, %v202
        %v210 = vpack.c.b16 %v205, %v204
        %v211 = vpack.c.b16 %v207, %v206
        %v216 = vunpack.c.l.b16 %v188
        %v217 = vunpack.c.l.b16 %v189
        %v218 = vunpack.c.l.b16 %v190
        %v219 = vunpack.c.l.b16 %v191
        %v220 = vpack.c.b16 %v217, %v216
        %v221 = vpack.c.b16 %v219, %v218
        %vm224 = vcmask 261120
        %v226 = vsel %vm224, %v208, 0
        %v229 = vsel %vm224, %v209, 0
        %v232 = vsel %vm224, %v210, 0
        %v235 = vsel %vm224, %v211, 0
        %237 = vmatprep.subr.bf16.mxu0 0
        %238 = vmatpush1.bf16.msra.mxu0 %v220
        %239 = vmatprep.subr.bf16.mxu0 0
        %240 = vmatpush1.bf16.msra.mxu0 %v221
        %241 = vmatprep.subr.bf16.mxu0 0
        %242 = vmatpush1.bf16.msra.mxu0 0
        %243 = vmatprep.subr.bf16.mxu0 0
        %244 = vmatpush1.bf16.msra.mxu0 0
        %245 = vmatprep.subr.bf16.mxu0 0
        %246 = vmatpush1.bf16.msra.mxu0 0
        %247 = vmatprep.subr.bf16.mxu0 0
        %248 = vmatpush1.bf16.msra.mxu0 0
        %249 = vmatprep.subr.bf16.mxu0 0
        %250 = vmatpush1.bf16.msra.mxu0 0
        %251 = vmatprep.subr.bf16.mxu0 0
        %252 = vmatpush1.bf16.msra.mxu0 0
        %253 = vmatprep.subr.bf16.mxu0 0
        %254 = vmatpush1.bf16.msra.mxu0 0
        %255 = vmatprep.subr.bf16.mxu0 0
        %256 = vmatpush1.bf16.msra.mxu0 0
        %257 = vmatprep.subr.bf16.mxu0 0
        %258 = vmatpush1.bf16.msra.mxu0 0
        %259 = vmatprep.subr.bf16.mxu0 0
        %260 = vmatpush1.bf16.msra.mxu0 0
        %261 = vmatprep.subr.bf16.mxu0 0
        %262 = vmatpush1.bf16.msra.mxu0 0
        %263 = vmatprep.subr.bf16.mxu0 0
        %264 = vmatpush1.bf16.msra.mxu0 0
        %265 = vmatprep.subr.bf16.mxu0 0
        %266 = vmatpush1.bf16.msra.mxu0 0
        %267 = vmatprep.subr.bf16.mxu0 0
        %268 = vmatpush1.bf16.msra.mxu0 0
        %269 = vmatprep.mubr.bf16.mxu0 0
        %270 = vmatmul.mubr.bf16.gmra.mrb[0].mxu0 %v226
        %v271 = vpop.f32.mrb[0].mxu0
        %v272 = vadd.f32 0.0, %v271
        %v273 = vpop.f32.mrb[0].mxu0
        %v274 = vpop.f32.mrb[0].mxu0
        %v275 = vadd.f32 0.0, %v274
        %v276 = vpop.f32.mrb[0].mxu0
        %277 = vmatprep.mubr.bf16.mxu0 0
        %278 = vmatmul.mubr.bf16.gmra.mrb[0].mxu0 %v229
        %v279 = vpop.f32.mrb[0].mxu0
        %v280 = vadd.f32 0.0, %v279
        %v281 = vpop.f32.mrb[0].mxu0
        %v282 = vpop.f32.mrb[0].mxu0
        %v283 = vadd.f32 0.0, %v282
        %v284 = vpop.f32.mrb[0].mxu0
        %285 = vmatprep.mubr.bf16.mxu0 0
        %286 = vmatmul.mubr.bf16.gmra.mrb[0].mxu0 %v232
        %v287 = vpop.f32.mrb[0].mxu0
        %v288 = vadd.f32 0.0, %v287
        %v289 = vpop.f32.mrb[0].mxu0
        %v290 = vpop.f32.mrb[0].mxu0
        %v291 = vadd.f32 0.0, %v290
        %v292 = vpop.f32.mrb[0].mxu0
        %293 = vmatprep.mubr.bf16.mxu0 0
        %294 = vmatmul.mubr.bf16.gmra.mrb[0].mxu0 %v235
        %v295 = vpop.f32.mrb[0].mxu0
        %v296 = vadd.f32 0.0, %v295
        %v297 = vpop.f32.mrb[0].mxu0
        %v298 = vpop.f32.mrb[0].mxu0
        %v299 = vadd.f32 0.0, %v298
        %v300 = vpop.f32.mrb[0].mxu0
        %301 = vdwg.mxu0
        %v303 = vunpack.c.l.b16 %v174
        %v304 = vpack.c.b16 %v200, %v303
        %v305 = vpack.c.b16 %v202, %v201
        %v306 = vpack.c.b16 %v204, %v203
        %v307 = vpack.c.b16 %v206, %v205
        %v312 = vunpack.c.l.b16 %v182
        %v313 = vunpack.c.l.b16 %v183
        %v314 = vunpack.c.l.b16 %v184
        %v315 = vunpack.c.l.b16 %v185
        %v316 = vpack.c.b16 %v313, %v312
        %v317 = vpack.c.b16 %v315, %v314
        %v321 = vsel %vm224, %v304, 0
        %v324 = vsel %vm224, %v305, 0
        %v327 = vsel %vm224, %v306, 0
        %v330 = vsel %vm224, %v307, 0
        %332 = vmatprep.subr.bf16.mxu0 0
        %333 = vmatpush1.bf16.msra.mxu0 %v316
        %334 = vmatprep.subr.bf16.mxu0 0
        %335 = vmatpush1.bf16.msra.mxu0 %v317
        %336 = vmatprep.subr.bf16.mxu0 0
        %337 = vmatpush1.bf16.msra.mxu0 0
        %338 = vmatprep.subr.bf16.mxu0 0
        %339 = vmatpush1.bf16.msra.mxu0 0
        %340 = vmatprep.subr.bf16.mxu0 0
        %341 = vmatpush1.bf16.msra.mxu0 0
        %342 = vmatprep.subr.bf16.mxu0 0
        %343 = vmatpush1.bf16.msra.mxu0 0
        %344 = vmatprep.subr.bf16.mxu0 0
        %345 = vmatpush1.bf16.msra.mxu0 0
        %346 = vmatprep.subr.bf16.mxu0 0
        %347 = vmatpush1.bf16.msra.mxu0 0
        %348 = vmatprep.subr.bf16.mxu0 0
        %349 = vmatpush1.bf16.msra.mxu0 0
        %350 = vmatprep.subr.bf16.mxu0 0
        %351 = vmatpush1.bf16.msra.mxu0 0
        %352 = vmatprep.subr.bf16.mxu0 0
        %353 = vmatpush1.bf16.msra.mxu0 0
        %354 = vmatprep.subr.bf16.mxu0 0
        %355 = vmatpush1.bf16.msra.mxu0 0
        %356 = vmatprep.subr.bf16.mxu0 0
        %357 = vmatpush1.bf16.msra.mxu0 0
        %358 = vmatprep.subr.bf16.mxu0 0
        %359 = vmatpush1.bf16.msra.mxu0 0
        %360 = vmatprep.subr.bf16.mxu0 0
        %361 = vmatpush1.bf16.msra.mxu0 0
        %362 = vmatprep.subr.bf16.mxu0 0
        %363 = vmatpush1.bf16.msra.mxu0 0
        %364 = vmatprep.mubr.bf16.mxu0 0
        %365 = vmatmul.mubr.bf16.gmra.mrb[0].mxu0 %v321
        %v366 = vpop.f32.mrb[0].mxu0
        %v367 = vadd.f32 %v272, %v366
        %v368 = vpop.f32.mrb[0].mxu0
        %v369 = vpop.f32.mrb[0].mxu0
        %v370 = vadd.f32 %v275, %v369
        %v371 = vpop.f32.mrb[0].mxu0
        %372 = vmatprep.mubr.bf16.mxu0 0
        %373 = vmatmul.mubr.bf16.gmra.mrb[0].mxu0 %v324
        %v374 = vpop.f32.mrb[0].mxu0
        %v375 = vadd.f32 %v280, %v374
        %v376 = vpop.f32.mrb[0].mxu0
        %v377 = vpop.f32.mrb[0].mxu0
        %v378 = vadd.f32 %v283, %v377
        %v379 = vpop.f32.mrb[0].mxu0
        %380 = vmatprep.mubr.bf16.mxu0 0
        %381 = vmatmul.mubr.bf16.gmra.mrb[0].mxu0 %v327
        %v382 = vpop.f32.mrb[0].mxu0
        %v383 = vadd.f32 %v288, %v382
        %v384 = vpop.f32.mrb[0].mxu0
        %v385 = vpop.f32.mrb[0].mxu0
        %v386 = vadd.f32 %v291, %v385
        %v387 = vpop.f32.mrb[0].mxu0
        %388 = vmatprep.mubr.bf16.mxu0 0
        %389 = vmatmul.mubr.bf16.gmra.mrb[0].mxu0 %v330
        %v390 = vpop.f32.mrb[0].mxu0
        %v391 = vadd.f32 %v296, %v390
        %v392 = vpop.f32.mrb[0].mxu0
        %v393 = vpop.f32.mrb[0].mxu0
        %v394 = vadd.f32 %v299, %v393
        %v395 = vpop.f32.mrb[0].mxu0
        %396 = vdwg.mxu0
        %v397 = vadd.f32 %v367, %v370
        %v398 = vadd.f32 %v397, %v375
        %v399 = vadd.f32 %v398, %v378
        %v400 = vadd.f32 %v399, %v383
        %v401 = vadd.f32 %v400, %v386
        %v402 = vadd.f32 %v401, %v391
        %v403 = vadd.f32 %v402, %v394
        %v404 = vrot.slane %v403, 4
        %v405 = vadd.f32 %v403, %v404
        %v406 = vrot.slane %v405, 2
        %v407 = vadd.f32 %v405, %v406
        %v408 = vrot.slane %v407, 1
        %v409 = vadd.f32 %v407, %v408
        %v410 = vrcp.pop 64.0
        %v411 = vmul.f32 %v409, %v410
        %v412 = vmul.f32 %v367, %v367
        %v413 = vmul.f32 %v370, %v370
        %v414 = vmul.f32 %v375, %v375
        %v415 = vmul.f32 %v378, %v378
        %v416 = vmul.f32 %v383, %v383
        %v417 = vmul.f32 %v386, %v386
        %v418 = vmul.f32 %v391, %v391
        %v419 = vmul.f32 %v394, %v394
        %v420 = vadd.f32 %v412, %v413
        %v421 = vadd.f32 %v420, %v414
        %v422 = vadd.f32 %v421, %v415
        %v423 = vadd.f32 %v422, %v416
        %v424 = vadd.f32 %v423, %v417
        %v425 = vadd.f32 %v424, %v418
        %v426 = vadd.f32 %v425, %v419
        %v427 = vrot.slane %v426, 4
        %v428 = vadd.f32 %v426, %v427
        %v429 = vrot.slane %v428, 2
        %v430 = vadd.f32 %v428, %v429
        %v431 = vrot.slane %v430, 1
        %v432 = vadd.f32 %v430, %v431
        %v433 = vmul.f32 %v432, %v410
        %v434 = vmul.f32 %v411, %v411
        %v435 = vsub.f32 %v433, %v434
        %v436 = vmax.f32 %v435, 0.0
        %v437 = vsub.f32 %v367, %v411
        %v438 = vsub.f32 %v370, %v411
        %v439 = vsub.f32 %v375, %v411
        %v440 = vsub.f32 %v378, %v411
        %v441 = vsub.f32 %v383, %v411
        %v442 = vsub.f32 %v386, %v411
        %v443 = vsub.f32 %v391, %v411
        %v444 = vsub.f32 %v394, %v411
        %v445 = vadd.f32 %v436, 1e-05
        %v446 = vrsqrt.pop %v445
        %v447 = vmul.f32 %v437, %v446
        %v448 = vmul.f32 %v438, %v446
        %v449 = vmul.f32 %v439, %v446
        %v450 = vmul.f32 %v440, %v446
        %v451 = vmul.f32 %v441, %v446
        %v452 = vmul.f32 %v442, %v446
        %v453 = vmul.f32 %v443, %v446
        %v454 = vmul.f32 %v444, %v446
        %v455 = vmax.f32 %v447, 0.0
        %v456 = vmax.f32 %v448, 0.0
        %v457 = vmax.f32 %v449, 0.0
        %v458 = vmax.f32 %v450, 0.0
        %v459 = vmax.f32 %v451, 0.0
        %v460 = vmax.f32 %v452, 0.0
        %v461 = vmax.f32 %v453, 0.0
        %v462 = vmax.f32 %v454, 0.0
        %463 = vst [vmem:[%s163] sm:$0xff] %v455
        %464 = vst [vmem:[%s163 + $0x8] sm:$0xff] %v456
        %465 = vst [vmem:[%s163 + $0x10] sm:$0xff] %v457
        %466 = vst [vmem:[%s163 + $0x18] sm:$0xff] %v458
        %467 = vst [vmem:[%s163 + $0x20] sm:$0xff] %v459
        %468 = vst [vmem:[%s163 + $0x28] sm:$0xff] %v460
        %469 = vst [vmem:[%s163 + $0x30] sm:$0xff] %v461
        %470 = vst [vmem:[%s163 + $0x38] sm:$0xff] %v462
        %s471 = sand.u32 %s90, 1
        %s472 = scalar_lea.sflag [#allocation3], %s471
        %s473 = sand.u32 %s90, 1
        %s474 = smul.addr %s473, 64
        %s475 = scalar_lea.vmem [#allocation2], %s474
        // Predicated region
        $region29: #{tpu_custom_call.1} parent=27 // pred_check
          %p476 = pneg %p100
        $region30: #{tpu_custom_call.1} parent=27 // pred_check_branch
          %478 = sbr.rel (%p476) target = $region32
        $region31: #{tpu_custom_call.1} parent=27 // pred_region
          %s480 = ssub.s32 1024, 1024
          %481 = vsyncadd %s472, %s480
          %s482 = smul.addr %s20, 8
          %s483 = sadd.s32 %s21, %s482
          %s484 = smul.addr %s483, 128
          %s485 = scalar_lea.hbm %s2, %s484
          %s486 = sshll.u32 %s475, 4
          %s487 = int_to_ptr.vmem [resolvable:$true] %s486
          %492 = dma.vmem_to_hbm [thread:$0]  %s487, 1024, %s485, %s472, 128, 128, 8
        $region32: #{tpu_custom_call.1} parent=27 // pred_fallthru
          _
      $region28: #{tpu_custom_call.1} parent=5 // pred_fallthru
        _
      %p493 = scmp.le.s32.totalorder 2, %s11
      // Predicated region
      $region33: #{tpu_custom_call.1} parent=5 // pred_check
        %p494 = pneg %p493
      $region34: #{tpu_custom_call.1} parent=5 // pred_check_branch
        %496 = sbr.rel (%p494) target = $region36
      $region35: #{tpu_custom_call.1} parent=5 // pred_region
        %s497 = ssub.s32 %s11, 2
        // Predicated region
        $region37: #{tpu_custom_call.1} parent=35 // pred_check
          %p498 = pneg %p106
        $region38: #{tpu_custom_call.1} parent=35 // pred_check_branch
          %500 = sbr.rel (%p498) target = $region40
        $region39: #{tpu_custom_call.1} parent=35 // pred_region
          %s501 = sand.u32 %s91, 1
          %s502 = scalar_lea.sflag [#allocation3], %s501
          %s503 = sand.u32 %s91, 1
          %s504 = smul.addr %s503, 64
          %s505 = scalar_lea.vmem [#allocation2], %s504
          %506 = dma.done %s502, 1024
        $region40: #{tpu_custom_call.1} parent=35 // pred_fallthru
          _
      $region36: #{tpu_custom_call.1} parent=5 // pred_fallthru
        _
    $region6: #{tpu_custom_call.1} parent=1 // loop_footer
      %s15 = sadd.s32 1, %s11
    $region7: #{tpu_custom_call.1} parent=1 // loop_footer_branch
      %10 = sbr.rel target = $region3
    $region8: #{tpu_custom_call.1} parent=1 // loop_exit
      _
    %507 = vsyncpa [#allocation3], 1
    %s508 = scalar_lea.sflag [#allocation3], 1
    %509 = vsyncpa %s508, 1

</llo_original>
